<compile_context>
chip_gen: v5e
topology: v5e:2x2
jax: 0.10.0
libtpu: 0.0.40
codegen_flags: <defaults>
</compile_context>

<pallas_src>
import functools

import numpy as np
import jax
import jax.numpy as jnp
from jax.experimental import pallas as pl
from jax.experimental.pallas import tpu as pltpu


def make_kernel(k):
    """Same as the PyTorch make_kernel, but in numpy (deterministic, trace-time)."""
    k = np.asarray(k, dtype=np.float32)
    if k.ndim == 1:
        k = k[None, :] * k[:, None]
    k = k / k.sum()
    return k


# --------------------------------------------------------------------------------------
# In-kernel helpers
# --------------------------------------------------------------------------------------

def _pad_axis(v, axis, before, after):
    """Zero-pad `v` along `axis` with small static widths (cheap concat, no scratch)."""
    if before == 0 and after == 0:
        return v
    parts = []
    if before:
        shp = list(v.shape)
        shp[axis] = before
        parts.append(jnp.zeros(shp, v.dtype))
    parts.append(v)
    if after:
        shp = list(v.shape)
        shp[axis] = after
        parts.append(jnp.zeros(shp, v.dtype))
    return jnp.concatenate(parts, axis=axis)


def _tap_window(j, pad_before, n_src, out_size):
    """Valid (dst_lo, dst_hi, src_lo) for FIR tap `j` with virtual zero padding/crop."""
    dst_lo = max(0, pad_before - j)
    dst_hi = min(out_size, n_src + pad_before - j)
    src_lo = dst_lo + j - pad_before
    return dst_lo, dst_hi, src_lo


def _fir_axis(read, taps, pad_before, n_src, out_size, axis, zeros_shape):
    """1-D FIR along `axis` with virtual zero padding (no materialized padded copy).

    read(src_lo, size) -> f32 slice of the source along `axis` (other axes full).
    Zero taps are skipped; the accumulator is initialized with the first non-zero tap.
    """
    acc = None
    for j, t in enumerate(taps):
        if t == 0.0:
            continue
        dst_lo, dst_hi, src_lo = _tap_window(j, pad_before, n_src, out_size)
        if dst_hi <= dst_lo:
            continue
        contrib = _pad_axis(read(src_lo, dst_hi - dst_lo) * t,
                            axis, dst_lo, out_size - dst_hi)
        acc = contrib if acc is None else acc + contrib
    if acc is None:
        acc = jnp.zeros(zeros_shape, jnp.float32)
    return acc


def _blur_sep_kernel(x_ref, o_ref, hz_ref, *, channels_last, w_taps, h_taps,
                     pad_w, pad_h, row0, n_rows, w, w_out, h_out):
    """Separable blur: horizontal 1-D FIR into hz scratch, then vertical 1-D FIR."""
    f32 = jnp.float32
    if channels_last:
        # Block = (H, W, C): channels on the lane axis (full-lane stores).
        lanes = x_ref.shape[2]

        def read_w(lo, size):
            return x_ref[row0:row0 + n_rows, lo:lo + size, :].astype(f32)

        hz_ref[...] = _fir_axis(read_w, w_taps, pad_w, w, w_out, axis=1,
                                zeros_shape=(n_rows, w_out, lanes))

        def read_h(lo, size):
            return hz_ref[lo:lo + size, :, :]

        out = _fir_axis(read_h, h_taps, pad_h, n_rows, h_out, axis=0,
                        zeros_shape=(h_out, w_out, lanes))
    else:
        # Block = (NC, H, W): width on the lane axis (used when W is already wide).
        b = x_ref.shape[0]

        def read_w(lo, size):
            return x_ref[:, row0:row0 + n_rows, lo:lo + size].astype(f32)

        hz_ref[...] = _fir_axis(read_w, w_taps, pad_w, w, w_out, axis=2,
                                zeros_shape=(b, n_rows, w_out))

        def read_h(lo, size):
            return hz_ref[:, lo:lo + size, :]

        out = _fir_axis(read_h, h_taps, pad_h, n_rows, h_out, axis=1,
                        zeros_shape=(b, h_out, w_out))
    o_ref[...] = out.astype(o_ref.dtype)


def _blur_2d_kernel(x_ref, o_ref, *, channels_last, taps2d, pad0, h, w, h_out, w_out):
    """Non-separable 2-D FIR fallback: clipped tap slices + register accumulation."""
    f32 = jnp.float32
    acc = None
    for i, row in enumerate(taps2d):
        dh_lo, dh_hi, sh_lo = _tap_window(i, pad0, h, h_out)
        if dh_hi <= dh_lo:
            continue
        for j, t in enumerate(row):
            if t == 0.0:
                continue
            dw_lo, dw_hi, sw_lo = _tap_window(j, pad0, w, w_out)
            if dw_hi <= dw_lo:
                continue
            if channels_last:
                core = x_ref[sh_lo:sh_lo + (dh_hi - dh_lo),
                             sw_lo:sw_lo + (dw_hi - dw_lo), :].astype(f32) * t
                core = _pad_axis(core, 1, dw_lo, w_out - dw_hi)
                core = _pad_axis(core, 0, dh_lo, h_out - dh_hi)
            else:
                core = x_ref[:, sh_lo:sh_lo + (dh_hi - dh_lo),
                             sw_lo:sw_lo + (dw_hi - dw_lo)].astype(f32) * t
                core = _pad_axis(core, 2, dw_lo, w_out - dw_hi)
                core = _pad_axis(core, 1, dh_lo, h_out - dh_hi)
            acc = core if acc is None else acc + core
    if acc is None:
        acc = jnp.zeros(o_ref.shape, f32)
    o_ref[...] = acc.astype(o_ref.dtype)


# --------------------------------------------------------------------------------------
# Wrapper: layout choice, VMEM budgeting, tiling, pallas_call
# --------------------------------------------------------------------------------------

def _round_up(v, m):
    return -(-v // m) * m


def _vmem_block_bytes(shape, dtype):
    """VMEM footprint of one buffered block, honoring (sublane, 128)-tile padding."""
    isz = np.dtype(dtype).itemsize
    sub = max(8, 32 // isz)          # 8 for f32, 16 for bf16/f16, 32 for int8/fp8
    dims = list(int(d) for d in shape)
    dims[-1] = _round_up(dims[-1], 128)
    if len(dims) >= 2:
        dims[-2] = _round_up(dims[-2], sub)
    total = isz
    for d in dims:
        total *= d
    return total


def _vmem_budget():
    """Generation-aware (budget_for_blocks_and_scratch, vmem_limit_bytes)."""
    try:
        cap = int(getattr(pltpu.get_tpu_info(), "vmem_capacity_bytes", 64 << 20))
    except Exception:                 # no TPU / interpret mode: be conservative
        cap = 64 << 20
    # ~35 MiB on v7x (64 MiB/core), ~56 MiB on v5e/v6e (128 MiB/core).
    budget = min(int(0.55 * cap), 56 << 20)
    limit = max(32 << 20, min(cap - (8 << 20), budget + (16 << 20)))
    return budget, limit


def blur(x, kernel_1d=(1, 3, 3, 1), pad=(2, 1), upsample_factor=1):
    """JAX/Pallas equivalent of Blur(kernel_1d, pad, upsample_factor)(x); x is NCHW."""
    x = jnp.asarray(x)
    n, c, h, w = x.shape
    pad0, pad1 = int(pad[0]), int(pad[1])

    k1 = np.asarray(kernel_1d, dtype=np.float32)
    separable = (k1.ndim == 1)
    if separable:
        a = k1 / k1.sum()                          # outer(a, a) == make_kernel(k1)
        if upsample_factor > 1:
            a = a * float(upsample_factor)         # uf**2 split per axis
        taps = tuple(float(t) for t in np.flip(a))  # conv2d uses the flipped kernel
        kh = kw = len(taps)
        taps2d = None
    else:
        k2 = make_kernel(k1)
        if upsample_factor > 1:
            k2 = k2 * (upsample_factor ** 2)
        kf = np.flip(k2, (0, 1))
        kh, kw = int(kf.shape[0]), int(kf.shape[1])
        taps2d = tuple(tuple(float(v) for v in row) for row in kf)
        taps = None

    h_out = h + pad0 + pad1 - kh + 1
    w_out = w + pad0 + pad1 - kw + 1
    if h_out <= 0 or w_out <= 0:
        raise ValueError(f"blur produces empty output: h_out={h_out}, w_out={w_out}")

    nc = n * c
    row0 = max(-pad0, 0)                            # first input row needed (crop)
    n_rows = h - max(-pad0, 0) - max(-pad1, 0)      # input rows that reach the output
    pad_h = max(pad0, 0)                            # zero rows above the kept rows
    if n_rows <= 0:                                 # fully cropped -> all-zero output
        return jnp.zeros((n, c, h_out, w_out), x.dtype)

    # Layout: put channels on the lane axis only when W is narrow and there are enough
    # channels to pay for the transpose round-trip (>=2x lane-density improvement).
    channels_last = (w_out < 128) and (min(nc, 128) >= 2 * min(max(w, w_out), 128))

    budget, vmem_limit = _vmem_budget()
    dt = x.dtype

    # Advisory cost estimate for XLA's scheduler around this custom call.
    if separable:
        nnz = sum(1 for t in taps if t != 0.0)
        flops = 2 * nc * (n_rows * w_out * nnz + h_out * w_out * nnz)
    else:
        nnz = sum(1 for r in taps2d for t in r if t != 0.0)
        flops = 2 * nc * h_out * w_out * nnz
    bytes_accessed = (x.size + nc * h_out * w_out) * np.dtype(dt).itemsize
    cost = pl.CostEstimate(flops=int(flops), transcendentals=0,
                           bytes_accessed=int(bytes_accessed))

    if channels_last:
        # (H, W, NC): channels on lanes -> full-lane (unmasked) output stores.
        xr = jnp.transpose(x.reshape(nc, h, w), (1, 2, 0))
        per = (2 * _vmem_block_bytes((h, w, 128), dt)
               + 2 * _vmem_block_bytes((h_out, w_out, 128), dt)
               + (_vmem_block_bytes((n_rows, w_out, 128), jnp.float32) if separable else 0))
        if nc <= 128:
            c_tile = nc                              # full (ragged) lane extent is allowed
        else:
            units_total = -(-nc // 128)
            units = max(1, min(budget // max(per, 1), units_total))
            if units >= units_total and units_total >= 2:
                units = (units_total + 1) // 2       # grid >= 2 so both v7x TCs get work
            c_tile = 128 * units
        grid = (-(-nc // c_tile),)
        in_specs = [pl.BlockSpec((h, w, c_tile), lambda i: (0, 0, i))]
        out_specs = pl.BlockSpec((h_out, w_out, c_tile), lambda i: (0, 0, i))
        out_shape = jax.ShapeDtypeStruct((h_out, w_out, nc), dt)
        scratch = ([pltpu.VMEM((n_rows, w_out, c_tile), jnp.float32)]
                   if separable else [])
    else:
        # (NC, H, W): W on lanes (already lane-dense for wide images; free reshape).
        xr = x.reshape(nc, h, w)
        per = (2 * _vmem_block_bytes((1, h, w), dt)
               + 2 * _vmem_block_bytes((1, h_out, w_out), dt)
               + (_vmem_block_bytes((1, n_rows, w_out), jnp.float32) if separable else 0))
        b_tile = max(1, min(nc, budget // max(per, 1)))
        if b_tile >= nc and nc >= 2:
            b_tile = (nc + 1) // 2                   # grid >= 2 so both v7x TCs get work
        grid = (-(-nc // b_tile),)
        in_specs = [pl.BlockSpec((b_tile, h, w), lambda i: (i, 0, 0))]
        out_specs = pl.BlockSpec((b_tile, h_out, w_out), lambda i: (i, 0, 0))
        out_shape = jax.ShapeDtypeStruct((nc, h_out, w_out), dt)
        scratch = ([pltpu.VMEM((b_tile, n_rows, w_out), jnp.float32)]
                   if separable else [])

    if separable:
        kern = functools.partial(
            _blur_sep_kernel, channels_last=channels_last, w_taps=taps, h_taps=taps,
            pad_w=pad0, pad_h=pad_h, row0=row0, n_rows=n_rows,
            w=w, w_out=w_out, h_out=h_out)
    else:
        kern = functools.partial(
            _blur_2d_kernel, channels_last=channels_last, taps2d=taps2d, pad0=pad0,
            h=h, w=w, h_out=h_out, w_out=w_out)

    out = pl.pallas_call(
        kern,
        out_shape=out_shape,
        grid=grid,
        in_specs=in_specs,
        out_specs=out_specs,
        scratch_shapes=scratch,
        compiler_params=pltpu.CompilerParams(
            dimension_semantics=("parallel",),
            vmem_limit_bytes=int(vmem_limit)),
        cost_estimate=cost,
    )(xr)

    if channels_last:
        return jnp.transpose(out, (2, 0, 1)).reshape(n, c, h_out, w_out)
    return out.reshape(n, c, h_out, w_out)


# --------------------------------------------------------------------------------------
# Pure-JAX reference (same math, no Pallas) for correctness checks
# --------------------------------------------------------------------------------------

def _blur_reference(x, kernel_1d=(1, 3, 3, 1), pad=(2, 1), upsample_factor=1):
    k = make_kernel(kernel_1d)
    if upsample_factor > 1:
        k = k * (upsample_factor ** 2)
    kf = jnp.asarray(np.flip(k, (0, 1)).copy())
    n, c, h, w = x.shape
    pad0, pad1 = pad
    xp = jnp.pad(x, ((0, 0), (0, 0),
                     (max(pad0, 0), max(pad1, 0)),
                     (max(pad0, 0), max(pad1, 0))))
    if pad0 < 0 or pad1 < 0:
        xp = xp[:, :,
                max(-pad0, 0): xp.shape[2] - max(-pad1, 0),
                max(-pad0, 0): xp.shape[3] - max(-pad1, 0)]
    lhs = xp.reshape(n * c, 1, xp.shape[2], xp.shape[3])
    rhs = kf.reshape(1, 1, *kf.shape)
    out = jax.lax.conv_general_dilated(
        lhs, rhs, window_strides=(1, 1), padding="VALID",
        dimension_numbers=("NCHW", "OIHW", "NCHW"))
    return out.reshape(n, c, out.shape[2], out.shape[3])


if __name__ == "__main__":
    key = jax.random.PRNGKey(0)

    def _check(xv, kernel_1d, padv, uf):
        y = jax.block_until_ready(blur(xv, kernel_1d=kernel_1d, pad=padv,
                                       upsample_factor=uf))
        y_ref = jax.block_until_ready(_blur_reference(xv, kernel_1d, padv, uf))
        assert y.shape == y_ref.shape, (y.shape, y_ref.shape)
        err = float(jnp.max(jnp.abs(y.astype(jnp.float32) - y_ref.astype(jnp.float32))))
        assert jnp.allclose(y, y_ref, atol=1e-5, rtol=1e-5), err

    # Default Blur config: (NC, H, W) layout path, multi-step grid (b_tile=4, grid=2).
    x = jax.random.normal(key, (2, 4, 16, 16), dtype=jnp.float32)  # NCHW
    _check(x, (1, 3, 3, 1), (2, 1), 1)

    # Upsample-scaled variant (as used after the transposed conv in StyleGAN2).
    _check(x, (1, 3, 3, 1), (2, 1), 2)

    # Negative pad (crop) path.
    _check(x, (1, 3, 3, 1), (1, -1), 1)

    # Many channels, narrow W -> channels-on-lanes layout with a ragged last lane block.
    x2 = jax.random.normal(jax.random.PRNGKey(0), (2, 96, 8, 8), dtype=jnp.float32)
    _check(x2, (1, 3, 3, 1), (2, 1), 1)

    # Non-separable 2-D FIR fallback (no scratch).
    _check(x, ((1.0, 2.0, 1.0), (2.0, 4.0, 2.0), (1.0, 2.0, 1.0)), (1, 1), 1)

    print("KERNEL_OK")
</pallas_src>

<mosaic_0001>
module attributes {stable_mosaic.version = 11 : i64} {
  func.func @_blur_sep_kernel(%arg0: i32, %arg1: memref<4x16x16xf32, #tpu.memory_space<vmem>>, %arg2: memref<4x16x16xf32, #tpu.memory_space<vmem>>, %arg3: memref<4x16x16xf32, #tpu.memory_space<vmem>>) attributes {dimension_semantics = [#tpu.dimension_semantics<parallel>], iteration_bounds = array<i64: 2>, scalar_prefetch = 0 : i64, scratch_operands = 1 : i64, tpu.core_type = #tpu.core_type<tc>, window_params = [{transform_indices = @transform_0, window_bounds = array<i64: 4, 16, 16>}, {transform_indices = @transform_1, window_bounds = array<i64: 4, 16, 16>}]} {
    %c0 = arith.constant 0 : index
    %c0_0 = arith.constant 0 : index
    %c0_1 = arith.constant 0 : index
    %0 = vector.load %arg1[%c0, %c0_0, %c0_1] : memref<4x16x16xf32, #tpu.memory_space<vmem>>, vector<4x16x14xf32>
    %cst = arith.constant 1.250000e-01 : f32
    %1 = vector.broadcast %cst : f32 to vector<4x16x14xf32>
    %2 = arith.mulf %0, %1 : vector<4x16x14xf32>
    %cst_2 = arith.constant 0.000000e+00 : f32
    %3 = vector.broadcast %cst_2 : f32 to vector<4x16x2xf32>
    %4 = tpu.concatenate %3, %2 in 2 : vector<4x16x2xf32>, vector<4x16x14xf32> -> vector<4x16x16xf32>
    %c0_3 = arith.constant 0 : index
    %c0_4 = arith.constant 0 : index
    %c0_5 = arith.constant 0 : index
    %5 = vector.load %arg1[%c0_3, %c0_4, %c0_5] : memref<4x16x16xf32, #tpu.memory_space<vmem>>, vector<4x16x15xf32>
    %cst_6 = arith.constant 3.750000e-01 : f32
    %6 = vector.broadcast %cst_6 : f32 to vector<4x16x15xf32>
    %7 = arith.mulf %5, %6 : vector<4x16x15xf32>
    %cst_7 = arith.constant 0.000000e+00 : f32
    %8 = vector.broadcast %cst_7 : f32 to vector<4x16x1xf32>
    %9 = tpu.concatenate %8, %7 in 2 : vector<4x16x1xf32>, vector<4x16x15xf32> -> vector<4x16x16xf32>
    %10 = arith.addf %4, %9 : vector<4x16x16xf32>
    %c0_8 = arith.constant 0 : index
    %c0_9 = arith.constant 0 : index
    %c0_10 = arith.constant 0 : index
    %11 = vector.load %arg1[%c0_8, %c0_9, %c0_10] : memref<4x16x16xf32, #tpu.memory_space<vmem>>, vector<4x16x16xf32>
    %cst_11 = arith.constant 3.750000e-01 : f32
    %12 = vector.broadcast %cst_11 : f32 to vector<4x16x16xf32>
    %13 = arith.mulf %11, %12 : vector<4x16x16xf32>
    %14 = arith.addf %10, %13 : vector<4x16x16xf32>
    %c0_12 = arith.constant 0 : index
    %c0_13 = arith.constant 0 : index
    %c1 = arith.constant 1 : index
    %15 = vector.load %arg1[%c0_12, %c0_13, %c1] : memref<4x16x16xf32, #tpu.memory_space<vmem>>, vector<4x16x15xf32>
    %cst_14 = arith.constant 1.250000e-01 : f32
    %16 = vector.broadcast %cst_14 : f32 to vector<4x16x15xf32>
    %17 = arith.mulf %15, %16 : vector<4x16x15xf32>
    %cst_15 = arith.constant 0.000000e+00 : f32
    %18 = vector.broadcast %cst_15 : f32 to vector<4x16x1xf32>
    %19 = tpu.concatenate %17, %18 in 2 : vector<4x16x15xf32>, vector<4x16x1xf32> -> vector<4x16x16xf32>
    %20 = arith.addf %14, %19 : vector<4x16x16xf32>
    %c0_16 = arith.constant 0 : index
    %c0_17 = arith.constant 0 : index
    %c0_18 = arith.constant 0 : index
    %21 = vector.load %arg3[%c0_16, %c0_17, %c0_18] : memref<4x16x16xf32, #tpu.memory_space<vmem>>, vector<4x16x16xf32>
    tpu.vector_store %arg3[%c0_16, %c0_17, %c0_18], %20 {strides = array<i32>} : memref<4x16x16xf32, #tpu.memory_space<vmem>>, vector<4x16x16xf32>,
    %c0_19 = arith.constant 0 : index
    %c0_20 = arith.constant 0 : index
    %c0_21 = arith.constant 0 : index
    %22 = vector.load %arg3[%c0_19, %c0_20, %c0_21] : memref<4x16x16xf32, #tpu.memory_space<vmem>>, vector<4x14x16xf32>
    %cst_22 = arith.constant 1.250000e-01 : f32
    %23 = vector.broadcast %cst_22 : f32 to vector<4x14x16xf32>
    %24 = arith.mulf %22, %23 : vector<4x14x16xf32>
    %cst_23 = arith.constant 0.000000e+00 : f32
    %25 = vector.broadcast %cst_23 : f32 to vector<4x2x16xf32>
    %26 = tpu.concatenate %25, %24 in 1 : vector<4x2x16xf32>, vector<4x14x16xf32> -> vector<4x16x16xf32>
    %c0_24 = arith.constant 0 : index
    %c0_25 = arith.constant 0 : index
    %c0_26 = arith.constant 0 : index
    %27 = vector.load %arg3[%c0_24, %c0_25, %c0_26] : memref<4x16x16xf32, #tpu.memory_space<vmem>>, vector<4x15x16xf32>
    %cst_27 = arith.constant 3.750000e-01 : f32
    %28 = vector.broadcast %cst_27 : f32 to vector<4x15x16xf32>
    %29 = arith.mulf %27, %28 : vector<4x15x16xf32>
    %cst_28 = arith.constant 0.000000e+00 : f32
    %30 = vector.broadcast %cst_28 : f32 to vector<4x1x16xf32>
    %31 = tpu.concatenate %30, %29 in 1 : vector<4x1x16xf32>, vector<4x15x16xf32> -> vector<4x16x16xf32>
    %32 = arith.addf %26, %31 : vector<4x16x16xf32>
    %c0_29 = arith.constant 0 : index
    %c0_30 = arith.constant 0 : index
    %c0_31 = arith.constant 0 : index
    %33 = vector.load %arg3[%c0_29, %c0_30, %c0_31] : memref<4x16x16xf32, #tpu.memory_space<vmem>>, vector<4x16x16xf32>
    %cst_32 = arith.constant 3.750000e-01 : f32
    %34 = vector.broadcast %cst_32 : f32 to vector<4x16x16xf32>
    %35 = arith.mulf %33, %34 : vector<4x16x16xf32>
    %36 = arith.addf %32, %35 : vector<4x16x16xf32>
    %c0_33 = arith.constant 0 : index
    %c1_34 = arith.constant 1 : index
    %c0_35 = arith.constant 0 : index
    %37 = vector.load %arg3[%c0_33, %c1_34, %c0_35] : memref<4x16x16xf32, #tpu.memory_space<vmem>>, vector<4x15x16xf32>
    %cst_36 = arith.constant 1.250000e-01 : f32
    %38 = vector.broadcast %cst_36 : f32 to vector<4x15x16xf32>
    %39 = arith.mulf %37, %38 : vector<4x15x16xf32>
    %cst_37 = arith.constant 0.000000e+00 : f32
    %40 = vector.broadcast %cst_37 : f32 to vector<4x1x16xf32>
    %41 = tpu.concatenate %39, %40 in 1 : vector<4x15x16xf32>, vector<4x1x16xf32> -> vector<4x16x16xf32>
    %42 = arith.addf %36, %41 : vector<4x16x16xf32>
    %c0_38 = arith.constant 0 : index
    %c0_39 = arith.constant 0 : index
    %c0_40 = arith.constant 0 : index
    %43 = vector.load %arg2[%c0_38, %c0_39, %c0_40] : memref<4x16x16xf32, #tpu.memory_space<vmem>>, vector<4x16x16xf32>
    tpu.vector_store %arg2[%c0_38, %c0_39, %c0_40], %42 {strides = array<i32>} : memref<4x16x16xf32, #tpu.memory_space<vmem>>, vector<4x16x16xf32>,
    return
  }
  func.func @transform_0(%arg0: i32) -> (i32, i32, i32) {
    %c0_i32 = arith.constant 0 : i32
    %c0_i32_0 = arith.constant 0 : i32
    %c0_i32_1 = arith.constant 0 : i32
    return %arg0, %c0_i32, %c0_i32_0 : i32, i32, i32
  }
  func.func @transform_1(%arg0: i32) -> (i32, i32, i32) {
    %c0_i32 = arith.constant 0 : i32
    %c0_i32_0 = arith.constant 0 : i32
    %c0_i32_1 = arith.constant 0 : i32
    return %arg0, %c0_i32, %c0_i32_0 : i32, i32, i32
  }
}

</mosaic_0001>

<llo_original>
// kernel: tpu_custom_call.1
$region0: #{tpu_custom_call.1}
  #allocation0 [shape = 'u32[]', space=smem, size = 0x4, offset = 0x4, fixed_abs, tag = 'smem constant byte address 0x4 - core index']
  #allocation1 [shape = 'u32[72,128]{1,0:T(1,128)}', space=vmem, size = 0x9000, scoped, tag = 'internal scratch']
  #allocation2 [shape = 'f32[4,16,16]{2,1,0:T(8,128)}', space=vmem, size = 0x8000, scoped, tag = 'scratch operand']
  %s0 = inlined_call_operand.hbm [shape: f32[8,16,16], index: 0, kind: input, shape index: {}]
  %s1 = inlined_call_operand.hbm [shape: f32[8,16,16], index: 1, kind: output, shape index: {}]
  %s2 = sld [smem:[#allocation0]]
  $region41: #{tpu_custom_call.1} parent=0
    _
  %s4 = ssub.s32 1, %s2
  %s5 = scalar_select 0, %s4, %s2
  $region1: #{tpu_custom_call.1} parent=0
    #allocation3 [shape = 'u8[65536]{0}', space=vmem, size = 0x10000, scoped, tag = 'input window, operand 0']
    #allocation4 [shape = 's32[2]{0}', space=sflag, size = 0x8, scoped, tag = 'scoped memory for tpu_custom_call.1']
    #allocation5 [shape = 's32[2]{0}', space=sflag, size = 0x8, scoped, tag = 'scoped memory for tpu_custom_call.1']
    #allocation6 [shape = 'u8[65536]{0}', space=vmem, size = 0x10000, scoped, tag = 'output window, operand 0']
    %6 = vsyncpa [#allocation4], 0
    %s7 = scalar_lea.sflag [#allocation4], 1
    %8 = vsyncpa %s7, 0
    %9 = vsyncpa [#allocation5], 0
    %s10 = scalar_lea.sflag [#allocation5], 1
    %11 = vsyncpa %s10, 0
    loop: start=0, step=1, limit=4
    $region2: #{tpu_custom_call.1} parent=1 // loop_pre_header
      _
    $region3: #{tpu_custom_call.1} parent=1 // loop_header
      %s13 = sphi 0, %s17
      %p14 = scmp.ge.s32.totalorder %s13, 4
      %s23 = sphi 0, %s25
      %s26 = sphi 0, %s23
      %s27 = sphi 0, %s26
      %s43 = sphi 0, %s27
      %s49 = sphi 0, %s51
      %s52 = sphi 0, %s49
      %s53 = sphi 0, %s52
      %s69 = sphi 0, %s53
    $region4: #{tpu_custom_call.1} parent=1 // loop_header_branch
      %16 = sbr.rel (%p14) target = $region8
    $region5: #{tpu_custom_call.1} parent=1 // loop_body
      %s18 = ssub.s32 %s13, 1
      %s19 = ssub.s32 %s13, 2
      %s20 = sadd.s32 %s13, 1
      %s21 = ssub.s32 %s13, %s20
      %p22 = scmp.eq.s32.totalorder %s21, 0
      %s24 = sadd.s32 %s23, 1
      %s25 = scalar_select %p22, %s23, %s24
      %p28 = pneg %p22
      %p29 = scmp.eq.s32.totalorder %s13, 1
      %p30 = por %p28, %p29
      %p31 = scmp.ne.s32.totalorder %s23, %s26
      %p32 = scmp.eq.s32.totalorder %s13, 0
      %p33 = por %p31, %p32
      %p34 = scmp.ne.s32.totalorder %s23, %s26
      %p35 = scmp.eq.s32.totalorder %s18, 1
      %p36 = por %p34, %p35
      %p37 = scmp.ne.s32.totalorder %s26, %s27
      %p38 = scmp.eq.s32.totalorder %s18, 0
      %p39 = por %p37, %p38
      %p40 = scmp.ne.s32.totalorder %s26, %s27
      %p41 = scmp.eq.s32.totalorder %s19, 1
      %p42 = por %p40, %p41
      %p44 = scmp.ne.s32.totalorder %s27, %s43
      %p45 = scmp.eq.s32.totalorder %s19, 0
      %p46 = por %p44, %p45
      %s47 = ssub.s32 %s13, %s20
      %p48 = scmp.eq.s32.totalorder %s47, 0
      %s50 = sadd.s32 %s49, 1
      %s51 = scalar_select %p48, %s49, %s50
      %p54 = pneg %p48
      %p55 = scmp.eq.s32.totalorder %s13, 1
      %p56 = por %p54, %p55
      %p57 = scmp.ne.s32.totalorder %s49, %s52
      %p58 = scmp.eq.s32.totalorder %s13, 0
      %p59 = por %p57, %p58
      %p60 = scmp.ne.s32.totalorder %s49, %s52
      %p61 = scmp.eq.s32.totalorder %s18, 1
      %p62 = por %p60, %p61
      %p63 = scmp.ne.s32.totalorder %s52, %s53
      %p64 = scmp.eq.s32.totalorder %s18, 0
      %p65 = por %p63, %p64
      %p66 = scmp.ne.s32.totalorder %s52, %s53
      %p67 = scmp.eq.s32.totalorder %s19, 1
      %p68 = por %p66, %p67
      %p70 = scmp.ne.s32.totalorder %s53, %s69
      %p71 = scmp.eq.s32.totalorder %s19, 0
      %p72 = por %p70, %p71
      %p73 = scmp.le.s32.totalorder 1, %s13
      %p74 = scmp.lt.s32.totalorder %s13, 3
      %p75 = pnand %p73, %p74
      %p76 = pneg %p75
      // Predicated region
      $region9: #{tpu_custom_call.1} parent=5 // pred_check
        _
      $region10: #{tpu_custom_call.1} parent=5 // pred_check_branch
        %78 = sbr.rel (%p75) target = $region12
      $region11: #{tpu_custom_call.1} parent=5 // pred_region
        %s79 = ssub.s32 %s13, 1
      $region12: #{tpu_custom_call.1} parent=5 // pred_fallthru
        _
      %p80 = scmp.lt.s32.totalorder %s13, 2
      // Predicated region
      $region13: #{tpu_custom_call.1} parent=5 // pred_check
        %p81 = pneg %p80
      $region14: #{tpu_custom_call.1} parent=5 // pred_check_branch
        %83 = sbr.rel (%p81) target = $region16
      $region15: #{tpu_custom_call.1} parent=5 // pred_region
        // Predicated region
        $region17: #{tpu_custom_call.1} parent=15 // pred_check
          %p84 = pneg %p33
        $region18: #{tpu_custom_call.1} parent=15 // pred_check_branch
          %86 = sbr.rel (%p84) target = $region20
        $region19: #{tpu_custom_call.1} parent=15 // pred_region
          %s87 = sand.u32 %s23, 1
          %s88 = scalar_lea.sflag [#allocation4], %s87
          %s89 = sand.u32 %s23, 1
          %s90 = smul.addr %s89, 64
          %s91 = scalar_lea.vmem [#allocation3], %s90
          %s92 = smul.u32 4, %s13
          %94 = vsyncadd %s88, 0
          %s95 = smul.addr %s92, 2
          %s96 = smul.addr %s95, 8
          %s97 = scalar_lea.hbm %s0, %s96
          %s98 = sshll.u32 %s97, 4
          %s99 = int_to_ptr.hbm [resolvable:$true] %s98
          %s100 = sshll.u32 %s91, 4
          %s101 = int_to_ptr.vmem [resolvable:$true] %s100
          %106 = dma.hbm_to_vmem [thread:$0]  %s99, 1024, %s101, %s88, 128, 128, 8
        $region20: #{tpu_custom_call.1} parent=15 // pred_fallthru
          _
      $region16: #{tpu_custom_call.1} parent=5 // pred_fallthru
        _
      %p107 = scmp.le.s32.totalorder 1, %s13
      %p108 = scmp.lt.s32.totalorder %s13, 3
      %p109 = pnand %p107, %p108
      %p110 = pneg %p109
      // Predicated region
      $region21: #{tpu_custom_call.1} parent=5 // pred_check
        _
      $region22: #{tpu_custom_call.1} parent=5 // pred_check_branch
        %112 = sbr.rel (%p109) target = $region24
      $region23: #{tpu_custom_call.1} parent=5 // pred_region
        %s113 = ssub.s32 %s13, 1
        %s114 = sand.u32 %s26, 1
        %s115 = scalar_lea.sflag [#allocation4], %s114
        %s116 = sand.u32 %s26, 1
        %s117 = smul.addr %s116, 64
        %s118 = scalar_lea.vmem [#allocation3], %s117
        // Predicated region
        $region25: #{tpu_custom_call.1} parent=23 // pred_check
          %p119 = pneg %p39
        $region26: #{tpu_custom_call.1} parent=23 // pred_check_branch
          %121 = sbr.rel (%p119) target = $region28
        $region27: #{tpu_custom_call.1} parent=23 // pred_region
          %123 = dma.done %s115, 1024
        $region28: #{tpu_custom_call.1} parent=23 // pred_fallthru
          _
        %s124 = sand.u32 %s26, 1
        %s125 = scalar_lea.sflag [#allocation4], %s124
        %s126 = sand.u32 %s26, 1
        %s127 = smul.addr %s126, 64
        %s128 = scalar_lea.vmem [#allocation3], %s127
        %p129 = pneg %p39
        %p130 = pneg %p36
        %p131 = pneg %p65
        %p132 = pneg %p62
        %s133 = sand.u32 %s52, 1
        %s134 = scalar_lea.sflag [#allocation5], %s133
        %s135 = sand.u32 %s52, 1
        %s136 = smul.addr %s135, 64
        %s137 = scalar_lea.vmem [#allocation6], %s136
        %s138 = smul.u32 4, %s18
        %s139 = smul.u32 4, %s18
        %v140 = vld [vmem:[%s118] sm:$0xff]
        %v141 = vld [vmem:[%s118 + $0x8] sm:$0xff]
        %v142 = vld [vmem:[%s118 + $0x10] sm:$0xff]
        %v143 = vld [vmem:[%s118 + $0x18] sm:$0xff]
        %v144 = vld [vmem:[%s118 + $0x20] sm:$0xff]
        %v145 = vld [vmem:[%s118 + $0x28] sm:$0xff]
        %v146 = vld [vmem:[%s118 + $0x30] sm:$0xff]
        %v147 = vld [vmem:[%s118 + $0x38] sm:$0xff]
        %v148 = vmul.f32 %v140, 0.125
        %v149 = vmul.f32 %v141, 0.125
        %v150 = vmul.f32 %v142, 0.125
        %v151 = vmul.f32 %v143, 0.125
        %v152 = vmul.f32 %v144, 0.125
        %v153 = vmul.f32 %v145, 0.125
        %v154 = vmul.f32 %v146, 0.125
        %v155 = vmul.f32 %v147, 0.125
        %164 = vrot.lane.b32.xlu0 %v148, 2
        %v165 = vpop.permute.xlu0 %164
        %166 = vrot.lane.b32.xlu0 %v149, 2
        %v167 = vpop.permute.xlu0 %166
        %168 = vrot.lane.b32.xlu0 %v150, 2
        %v169 = vpop.permute.xlu0 %168
        %170 = vrot.lane.b32.xlu0 %v151, 2
        %v171 = vpop.permute.xlu0 %170
        %172 = vrot.lane.b32.xlu0 %v152, 2
        %v173 = vpop.permute.xlu0 %172
        %174 = vrot.lane.b32.xlu0 %v153, 2
        %v175 = vpop.permute.xlu0 %174
        %176 = vrot.lane.b32.xlu0 %v154, 2
        %v177 = vpop.permute.xlu0 %176
        %178 = vrot.lane.b32.xlu0 %v155, 2
        %v179 = vpop.permute.xlu0 %178
        %vm188 = vcmask 15360
        %v189 = vsel %vm188, 0.0, %v165
        %v190 = vsel %vm188, 0.0, %v167
        %v191 = vsel %vm188, 0.0, %v169
        %v192 = vsel %vm188, 0.0, %v171
        %v193 = vsel %vm188, 0.0, %v173
        %v194 = vsel %vm188, 0.0, %v175
        %v195 = vsel %vm188, 0.0, %v177
        %v196 = vsel %vm188, 0.0, %v179
        %v197 = vmul.f32 %v140, 0.375
        %v198 = vmul.f32 %v141, 0.375
        %v199 = vmul.f32 %v142, 0.375
        %v200 = vmul.f32 %v143, 0.375
        %v201 = vmul.f32 %v144, 0.375
        %v202 = vmul.f32 %v145, 0.375
        %v203 = vmul.f32 %v146, 0.375
        %v204 = vmul.f32 %v147, 0.375
        %213 = vrot.lane.b32.xlu0 %v197, 1
        %v214 = vpop.permute.xlu0 %213
        %215 = vrot.lane.b32.xlu0 %v198, 1
        %v216 = vpop.permute.xlu0 %215
        %217 = vrot.lane.b32.xlu0 %v199, 1
        %v218 = vpop.permute.xlu0 %217
        %219 = vrot.lane.b32.xlu0 %v200, 1
        %v220 = vpop.permute.xlu0 %219
        %221 = vrot.lane.b32.xlu0 %v201, 1
        %v222 = vpop.permute.xlu0 %221
        %223 = vrot.lane.b32.xlu0 %v202, 1
        %v224 = vpop.permute.xlu0 %223
        %225 = vrot.lane.b32.xlu0 %v203, 1
        %v226 = vpop.permute.xlu0 %225
        %227 = vrot.lane.b32.xlu0 %v204, 1
        %v228 = vpop.permute.xlu0 %227
        %vm237 = vcmask 7168
        %v238 = vsel %vm237, 0.0, %v214
        %v239 = vsel %vm237, 0.0, %v216
        %v240 = vsel %vm237, 0.0, %v218
        %v241 = vsel %vm237, 0.0, %v220
        %v242 = vsel %vm237, 0.0, %v222
        %v243 = vsel %vm237, 0.0, %v224
        %v244 = vsel %vm237, 0.0, %v226
        %v245 = vsel %vm237, 0.0, %v228
        %v246 = vadd.f32 %v189, %v238
        %v247 = vadd.f32 %v190, %v239
        %v248 = vadd.f32 %v191, %v240
        %v249 = vadd.f32 %v192, %v241
        %v250 = vadd.f32 %v193, %v242
        %v251 = vadd.f32 %v194, %v243
        %v252 = vadd.f32 %v195, %v244
        %v253 = vadd.f32 %v196, %v245
        %v254 = vadd.f32 %v246, %v197
        %v255 = vadd.f32 %v247, %v198
        %v256 = vadd.f32 %v248, %v199
        %v257 = vadd.f32 %v249, %v200
        %v258 = vadd.f32 %v250, %v201
        %v259 = vadd.f32 %v251, %v202
        %v260 = vadd.f32 %v252, %v203
        %v261 = vadd.f32 %v253, %v204
        %262 = vrot.lane.b32.xlu0 %v148, 127
        %v263 = vpop.permute.xlu0 %262
        %264 = vrot.lane.b32.xlu0 %v149, 127
        %v265 = vpop.permute.xlu0 %264
        %266 = vrot.lane.b32.xlu0 %v150, 127
        %v267 = vpop.permute.xlu0 %266
        %268 = vrot.lane.b32.xlu0 %v151, 127
        %v269 = vpop.permute.xlu0 %268
        %270 = vrot.lane.b32.xlu0 %v152, 127
        %v271 = vpop.permute.xlu0 %270
        %272 = vrot.lane.b32.xlu0 %v153, 127
        %v273 = vpop.permute.xlu0 %272
        %274 = vrot.lane.b32.xlu0 %v154, 127
        %v275 = vpop.permute.xlu0 %274
        %276 = vrot.lane.b32.xlu0 %v155, 127
        %v277 = vpop.permute.xlu0 %276
        %vm286 = vcmask 121856
        %v287 = vsel %vm286, %v263, 0.0
        %v288 = vsel %vm286, %v265, 0.0
        %v289 = vsel %vm286, %v267, 0.0
        %v290 = vsel %vm286, %v269, 0.0
        %v291 = vsel %vm286, %v271, 0.0
        %v292 = vsel %vm286, %v273, 0.0
        %v293 = vsel %vm286, %v275, 0.0
        %v294 = vsel %vm286, %v277, 0.0
        %v295 = vadd.f32 %v254, %v287
        %v296 = vadd.f32 %v255, %v288
        %v297 = vadd.f32 %v256, %v289
        %v298 = vadd.f32 %v257, %v290
        %v299 = vadd.f32 %v258, %v291
        %v300 = vadd.f32 %v259, %v292
        %v301 = vadd.f32 %v260, %v293
        %v302 = vadd.f32 %v261, %v294
        %vm303 = vcmask 130048
        %304 = vst.msk [vmem:[#allocation2] sm:$0xff] %vm303, %v295
        %305 = vst.msk [vmem:[#allocation2 + $0x8] sm:$0xff] %vm303, %v296
        %306 = vst.msk [vmem:[#allocation2 + $0x10] sm:$0xff] %vm303, %v297
        %307 = vst.msk [vmem:[#allocation2 + $0x18] sm:$0xff] %vm303, %v298
        %308 = vst.msk [vmem:[#allocation2 + $0x20] sm:$0xff] %vm303, %v299
        %309 = vst.msk [vmem:[#allocation2 + $0x28] sm:$0xff] %vm303, %v300
        %310 = vst.msk [vmem:[#allocation2 + $0x30] sm:$0xff] %vm303, %v301
        %311 = vst.msk [vmem:[#allocation2 + $0x38] sm:$0xff] %vm303, %v302
        %v312 = vld [vmem:[#allocation2] sm:$0xff]
        %v313 = vld [vmem:[#allocation2 + $0x8] sm:$0x3f]
        %v314 = vld [vmem:[#allocation2 + $0x10] sm:$0xff]
        %v315 = vld [vmem:[#allocation2 + $0x18] sm:$0x3f]
        %v316 = vld [vmem:[#allocation2 + $0x20] sm:$0xff]
        %v317 = vld [vmem:[#allocation2 + $0x28] sm:$0x3f]
        %v318 = vld [vmem:[#allocation2 + $0x30] sm:$0xff]
        %v319 = vld [vmem:[#allocation2 + $0x38] sm:$0x3f]
        %v320 = vmul.f32 %v312, 0.125
        %v321 = vmul.f32 %v313, 0.125
        %v322 = vmul.f32 %v314, 0.125
        %v323 = vmul.f32 %v315, 0.125
        %v324 = vmul.f32 %v316, 0.125
        %v325 = vmul.f32 %v317, 0.125
        %v326 = vmul.f32 %v318, 0.125
        %v327 = vmul.f32 %v319, 0.125
        %vm336 = vcmask 1041408
        %v337 = vrot.slane %v320, 6
        %v338 = vrot.slane %v321, 6
        %v339 = vsel %vm336, %v337, %v338
        %v340 = vrot.slane %v322, 6
        %v341 = vrot.slane %v323, 6
        %v342 = vsel %vm336, %v340, %v341
        %v343 = vrot.slane %v324, 6
        %v344 = vrot.slane %v325, 6
        %v345 = vsel %vm336, %v343, %v344
        %v346 = vrot.slane %v326, 6
        %v347 = vrot.slane %v327, 6
        %v348 = vsel %vm336, %v346, %v347
        %v357 = vsel %vm336, 0.0, %v337
        %v358 = vsel %vm336, 0.0, %v340
        %v359 = vsel %vm336, 0.0, %v343
        %v360 = vsel %vm336, 0.0, %v346
        %v361 = vld [vmem:[#allocation2 + $0x8] sm:$0x7f]
        %v362 = vld [vmem:[#allocation2 + $0x18] sm:$0x7f]
        %v363 = vld [vmem:[#allocation2 + $0x28] sm:$0x7f]
        %v364 = vld [vmem:[#allocation2 + $0x38] sm:$0x7f]
        %v365 = vmul.f32 %v312, 0.375
        %v366 = vmul.f32 %v361, 0.375
        %v367 = vmul.f32 %v314, 0.375
        %v368 = vmul.f32 %v362, 0.375
        %v369 = vmul.f32 %v316, 0.375
        %v370 = vmul.f32 %v363, 0.375
        %v371 = vmul.f32 %v318, 0.375
        %v372 = vmul.f32 %v364, 0.375
        %vm381 = vcmask 1040384
        %v382 = vrot.slane %v365, 7
        %v383 = vrot.slane %v366, 7
        %v384 = vsel %vm381, %v382, %v383
        %v385 = vrot.slane %v367, 7
        %v386 = vrot.slane %v368, 7
        %v387 = vsel %vm381, %v385, %v386
        %v388 = vrot.slane %v369, 7
        %v389 = vrot.slane %v370, 7
        %v390 = vsel %vm381, %v388, %v389
        %v391 = vrot.slane %v371, 7
        %v392 = vrot.slane %v372, 7
        %v393 = vsel %vm381, %v391, %v392
        %v402 = vsel %vm381, 0.0, %v382
        %v403 = vsel %vm381, 0.0, %v385
        %v404 = vsel %vm381, 0.0, %v388
        %v405 = vsel %vm381, 0.0, %v391
        %v406 = vadd.f32 %v357, %v402
        %v407 = vadd.f32 %v339, %v384
        %v408 = vadd.f32 %v358, %v403
        %v409 = vadd.f32 %v342, %v387
        %v410 = vadd.f32 %v359, %v404
        %v411 = vadd.f32 %v345, %v390
        %v412 = vadd.f32 %v360, %v405
        %v413 = vadd.f32 %v348, %v393
        %v414 = vld [vmem:[#allocation2 + $0x8] sm:$0xff]
        %v415 = vld [vmem:[#allocation2 + $0x18] sm:$0xff]
        %v416 = vld [vmem:[#allocation2 + $0x28] sm:$0xff]
        %v417 = vld [vmem:[#allocation2 + $0x38] sm:$0xff]
        %v418 = vmul.f32 %v414, 0.375
        %v419 = vmul.f32 %v415, 0.375
        %v420 = vmul.f32 %v416, 0.375
        %v421 = vmul.f32 %v417, 0.375
        %v422 = vadd.f32 %v406, %v365
        %v423 = vadd.f32 %v407, %v418
        %v424 = vadd.f32 %v408, %v367
        %v425 = vadd.f32 %v409, %v419
        %v426 = vadd.f32 %v410, %v369
        %v427 = vadd.f32 %v411, %v420
        %v428 = vadd.f32 %v412, %v371
        %v429 = vadd.f32 %v413, %v421
        %v430 = vld [vmem:[#allocation2 + $0x1] sm:$0xff]
        %v431 = vld [vmem:[#allocation2 + $0x9] sm:$0x7f]
        %v432 = vld [vmem:[#allocation2 + $0x11] sm:$0xff]
        %v433 = vld [vmem:[#allocation2 + $0x19] sm:$0x7f]
        %v434 = vld [vmem:[#allocation2 + $0x21] sm:$0xff]
        %v435 = vld [vmem:[#allocation2 + $0x29] sm:$0x7f]
        %v436 = vld [vmem:[#allocation2 + $0x31] sm:$0xff]
        %v437 = vld [vmem:[#allocation2 + $0x39] sm:$0x7f]
        %v438 = vmul.f32 %v430, 0.125
        %v439 = vmul.f32 %v431, 0.125
        %v440 = vmul.f32 %v432, 0.125
        %v441 = vmul.f32 %v433, 0.125
        %v442 = vmul.f32 %v434, 0.125
        %v443 = vmul.f32 %v435, 0.125
        %v444 = vmul.f32 %v436, 0.125
        %v445 = vmul.f32 %v437, 0.125
        %vm446 = vcmask 1046528
        %v447 = vsel %vm446, %v439, 0.0
        %v448 = vsel %vm446, %v441, 0.0
        %v449 = vsel %vm446, %v443, 0.0
        %v450 = vsel %vm446, %v445, 0.0
        %v451 = vadd.f32 %v422, %v438
        %v452 = vadd.f32 %v423, %v447
        %v453 = vadd.f32 %v424, %v440
        %v454 = vadd.f32 %v425, %v448
        %v455 = vadd.f32 %v426, %v442
        %v456 = vadd.f32 %v427, %v449
        %v457 = vadd.f32 %v428, %v444
        %v458 = vadd.f32 %v429, %v450
        %459 = vst.msk [vmem:[%s137] sm:$0xff] %vm303, %v451
        %460 = vst.msk [vmem:[%s137 + $0x8] sm:$0xff] %vm303, %v452
        %461 = vst.msk [vmem:[%s137 + $0x10] sm:$0xff] %vm303, %v453
        %462 = vst.msk [vmem:[%s137 + $0x18] sm:$0xff] %vm303, %v454
        %463 = vst.msk [vmem:[%s137 + $0x20] sm:$0xff] %vm303, %v455
        %464 = vst.msk [vmem:[%s137 + $0x28] sm:$0xff] %vm303, %v456
        %465 = vst.msk [vmem:[%s137 + $0x30] sm:$0xff] %vm303, %v457
        %466 = vst.msk [vmem:[%s137 + $0x38] sm:$0xff] %vm303, %v458
        %s467 = sand.u32 %s52, 1
        %s468 = scalar_lea.sflag [#allocation5], %s467
        %s469 = sand.u32 %s52, 1
        %s470 = smul.addr %s469, 64
        %s471 = scalar_lea.vmem [#allocation6], %s470
        // Predicated region
        $region29: #{tpu_custom_call.1} parent=23 // pred_check
          %p472 = pneg %p62
        $region30: #{tpu_custom_call.1} parent=23 // pred_check_branch
          %474 = sbr.rel (%p472) target = $region32
        $region31: #{tpu_custom_call.1} parent=23 // pred_region
          %s475 = smul.u32 4, %s18
          %477 = vsyncadd %s468, 0
          %s478 = smul.addr %s475, 2
          %s479 = smul.addr %s478, 8
          %s480 = scalar_lea.hbm %s1, %s479
          %s481 = sshll.u32 %s471, 4
          %s482 = int_to_ptr.vmem [resolvable:$true] %s481
          %s483 = sshll.u32 %s480, 4
          %s484 = int_to_ptr.hbm [resolvable:$true] %s483
          %489 = dma.vmem_to_hbm [thread:$0]  %s482, 1024, %s484, %s468, 128, 128, 8
        $region32: #{tpu_custom_call.1} parent=23 // pred_fallthru
          _
      $region24: #{tpu_custom_call.1} parent=5 // pred_fallthru
        _
      %p490 = scmp.le.s32.totalorder 2, %s13
      // Predicated region
      $region33: #{tpu_custom_call.1} parent=5 // pred_check
        %p491 = pneg %p490
      $region34: #{tpu_custom_call.1} parent=5 // pred_check_branch
        %493 = sbr.rel (%p491) target = $region36
      $region35: #{tpu_custom_call.1} parent=5 // pred_region
        %s494 = ssub.s32 %s13, 2
        // Predicated region
        $region37: #{tpu_custom_call.1} parent=35 // pred_check
          %p495 = pneg %p68
        $region38: #{tpu_custom_call.1} parent=35 // pred_check_branch
          %497 = sbr.rel (%p495) target = $region40
        $region39: #{tpu_custom_call.1} parent=35 // pred_region
          %s498 = sand.u32 %s53, 1
          %s499 = scalar_lea.sflag [#allocation5], %s498
          %s500 = sand.u32 %s53, 1
          %s501 = smul.addr %s500, 64
          %s502 = scalar_lea.vmem [#allocation6], %s501
          %504 = dma.done %s499, 1024
        $region40: #{tpu_custom_call.1} parent=35 // pred_fallthru
          _
      $region36: #{tpu_custom_call.1} parent=5 // pred_fallthru
        _
    $region6: #{tpu_custom_call.1} parent=1 // loop_footer
      %s17 = sadd.s32 1, %s13
    $region7: #{tpu_custom_call.1} parent=1 // loop_footer_branch
      %12 = sbr.rel target = $region3
    $region8: #{tpu_custom_call.1} parent=1 // loop_exit
      _
    %505 = vsyncpa [#allocation4], 1
    %s506 = scalar_lea.sflag [#allocation4], 1
    %507 = vsyncpa %s506, 1
    %508 = vsyncpa [#allocation5], 1
    %s509 = scalar_lea.sflag [#allocation5], 1
    %510 = vsyncpa %s509, 1

</llo_original>
